<compile_context>
chip_gen: v6e
topology: v6e:2x2x1
jax: 0.10.0
libtpu: 0.0.40
codegen_flags: <defaults>
</compile_context>

<pallas_src>
import jax
import jax.numpy as jnp
from jax.experimental import pallas as pl
from jax.experimental.pallas import tpu as pltpu

_LANE = 128
_BLOCK_ROWS = 2048          # (2048, 128) f32 block = 1 MiB
_NUM_VALS = 64
_SQRT_HALF = 0.7071067811865476

_INIT_VALS = [
    0.0, 0.0625, 0.125, 0.1875, 0.25, 0.3125, 0.375, 0.4375, 0.5, 0.625,
    0.75, 0.875, 1.0, 1.25, 1.5, 1.75, 2.0, 2.5, 3.0, 3.5, 4.0, 5.0, 6.0,
    7.0, 8.0, 10.0, 12.0, 14.0, 16.0, 20.0, 24.0, 28.0,
    -0.0625, -0.125, -0.1875, -0.25, -0.3125, -0.375, -0.4375, -0.5, -0.625,
    -0.75, -0.875, -1.0, -1.25, -1.5, -1.75, -2.0, -2.5, -3.0, -3.5, -4.0,
    -5.0, -6.0, -7.0, -8.0, -10.0, -12.0, -14.0, -16.0, -20.0, -24.0, -28.0,
    -32.0,
]


def _gelu_exact_f32(x, *, approx_recip):
    """Exact (erf-based) GELU in float32: 0.5 * x * (1 + erf(x / sqrt(2))).

    # TODO(synk): lax.erf (erf_p) has no Mosaic lowering; erf is evaluated with
    # the Abramowitz & Stegun 7.1.26 approximation (<= 1.5e-7 abs error), built
    # only from ops that lower on TPU.  The error is far below the FP6 table
    # spacing (>= 0.0625).
    """
    abs_x = jnp.abs(x)
    a = abs_x * _SQRT_HALF
    denom = 1.0 + 0.3275911 * a
    # approx reciprocal goes to the (nearly idle) EUP slot instead of the
    # saturated VALU slot; error << FP6 spacing.
    t = pl.reciprocal(denom, approx=True) if approx_recip else 1.0 / denom
    poly = t * (0.254829592
                + t * (-0.284496736
                       + t * (1.421413741
                              + t * (-1.453152027 + t * 1.061405429))))
    erf_abs = 1.0 - poly * jnp.exp(-(a * a))
    # erf is odd and sign(erf(x/sqrt2)) == sign(x), so
    #   0.5 * x * (1 + erf(x/sqrt2)) == 0.5 * (x + |x| * erf(|x|/sqrt2))
    # -> no sign select / negate needed.
    return 0.5 * (x + abs_x * erf_abs)


def _make_kernel(chain_dtype):
    """Kernel: GELU + nearest-FP6-value via a 63-step midpoint select chain.

    vals_ref: SMEM (64,) f32 sorted table; mids_ref: SMEM (63,) f32 midpoints.
    x_ref / o_ref: (block_rows, 128) VMEM tiles in the caller's dtype.
    chain_dtype: f32 everywhere; bf16 on v6e/v7x halves the VALU ops of the
    dominant compare/select chain (packed 16x128 per vreg).
    """
    low_precision = chain_dtype != jnp.float32

    def kernel(vals_ref, mids_ref, x_ref, o_ref):
        x = x_ref[...].astype(jnp.float32)
        y = _gelu_exact_f32(x, approx_recip=True)
        yc = y.astype(chain_dtype) if low_precision else y

        # Nearest-table-value via a running select over the 63 sorted midpoints.
        # y <= mid[j] keeps the lower value; y > mid[j] moves up to vals[j+1].
        # Matches searchsorted + clamp(1,63) + |y-low| <= |y-high| (ties->low).
        # TODO(synk): NaN inputs resolve every compare to False and map to
        # vals[0] rather than propagating; benign for this quantizer.
        q = jnp.full_like(yc, vals_ref[0])
        for j in range(_NUM_VALS - 1):
            mid = mids_ref[j]
            hi = vals_ref[j + 1]
            if low_precision:
                mid = mid.astype(chain_dtype)
                hi = hi.astype(chain_dtype)
            q = jnp.where(yc > mid, hi, q)

        o_ref[...] = q.astype(o_ref.dtype)

    return kernel


_KERNEL_F32 = _make_kernel(jnp.float32)
_KERNEL_BF16 = _make_kernel(jnp.bfloat16)


def make_fp6_tables(fp6_values):
    """Sorted table + decision midpoints.

    Hoist this out of the per-activation call when FP6GELU is applied many
    times per forward pass (forward does torch.sort(self.fp6_values))."""
    vals = jnp.sort(fp6_values.astype(jnp.float32))
    mids = 0.5 * (vals[:-1] + vals[1:])            # 63 decision midpoints
    return vals, mids


def _default_use_bf16_chain():
    """bf16 VPU exists on v6e (Trillium) and v7x; v5e and older lack it."""
    try:
        kind = jax.devices()[0].device_kind.lower()
    except Exception:
        return False
    return any(tag in kind for tag in ("v6", "v7", "7x", "trillium"))


def fp6_gelu_from_tables(x, vals, mids, *, use_bf16_chain=None):
    """x: any-shape float array. vals: (64,) sorted f32. mids: (63,) f32."""
    orig_shape = x.shape
    orig_dtype = x.dtype
    n = x.size
    if n == 0:
        return x
    if use_bf16_chain is None:
        use_bf16_chain = _default_use_bf16_chain()

    # Lane-dense 2-D slab in the ORIGINAL dtype (no wrapper-side f32 copy).
    flat = x.reshape(-1)
    rem = (-n) % _LANE
    if rem:
        flat = jnp.pad(flat, (0, rem))
    rows = flat.shape[0] // _LANE
    x2 = flat.reshape(rows, _LANE)

    # Full-dim block only for tiny inputs; otherwise force >= 2 grid steps so
    # both v7x TensorCores get work (block_rows must be a multiple of 8 unless
    # it equals the full row count).  Last block may be partial (Pallas masks
    # the out-of-bounds stores).
    block_rows = min(_BLOCK_ROWS, rows)
    if rows > 8:
        half = -(-rows // 2)
        half = -(-half // 8) * 8
        block_rows = min(block_rows, half)
    grid = (pl.cdiv(rows, block_rows),)

    def run(kernel):
        return pl.pallas_call(
            kernel,
            out_shape=jax.ShapeDtypeStruct((rows, _LANE), orig_dtype),
            grid_spec=pltpu.PrefetchScalarGridSpec(
                num_scalar_prefetch=0,
                grid=grid,
                in_specs=[
                    pl.BlockSpec(memory_space=pltpu.MemorySpace.SMEM),  # sorted vals
                    pl.BlockSpec(memory_space=pltpu.MemorySpace.SMEM),  # midpoints
                    pl.BlockSpec((block_rows, _LANE), lambda i: (i, 0)),
                ],
                out_specs=pl.BlockSpec((block_rows, _LANE), lambda i: (i, 0)),
            ),
            compiler_params=pltpu.CompilerParams(
                dimension_semantics=("parallel",),      # shards across v7x TCs
                vmem_limit_bytes=32 * 1024 * 1024,
            ),
        )(vals, mids, x2)

    if use_bf16_chain:
        try:
            out2 = run(_KERNEL_BF16)
        except Exception:
            # Fallback if the bf16 scalar-threshold variant does not lower on
            # this toolchain / chip; f32 chain is always supported.
            out2 = run(_KERNEL_F32)
    else:
        out2 = run(_KERNEL_F32)

    out_flat = out2.reshape(-1)
    if rem:
        out_flat = out_flat[:n]
    return out_flat.reshape(orig_shape)


def fp6_gelu(x, fp6_values, *, use_bf16_chain=None):
    """x: any-shape float array (e.g. NCHW). fp6_values: (64,) learnable table."""
    vals, mids = make_fp6_tables(fp6_values)
    return fp6_gelu_from_tables(x, vals, mids, use_bf16_chain=use_bf16_chain)


def _reference(x, fp6_values):
    """Pure-JAX reference mirroring the PyTorch forward (GELU -> FP6 quantize)."""
    vals = jnp.sort(fp6_values.astype(jnp.float32))
    y = jax.nn.gelu(x.astype(jnp.float32), approximate=False)
    idx = jnp.searchsorted(vals, y, side="left")
    idx = jnp.clip(idx, 1, vals.shape[0] - 1)
    high = vals[idx]
    low = vals[idx - 1]
    out = jnp.where(jnp.abs(y - low) <= jnp.abs(y - high), low, high)
    return out.astype(x.dtype)


if __name__ == "__main__":
    key = jax.random.PRNGKey(0)
    # Deterministic parameter init, exactly as in LearnableFP6Activation.__init__
    fp6_values = jnp.asarray(sorted(set(_INIT_VALS))[:64], dtype=jnp.float32)

    # Small NCHW-like input
    x = jax.random.normal(key, (2, 4, 16, 16), dtype=jnp.float32) * 3.0

    out = fp6_gelu(x, fp6_values)
    out = jax.block_until_ready(out)

    ref = _reference(x, fp6_values)
    assert out.shape == x.shape and out.dtype == x.dtype

    # Exact match expected except for genuine decision-boundary ties, where the
    # kernel's midpoint compare (bf16 on v6e/v7x, A&S erf, approx reciprocal)
    # and the reference's exact-erf distance compare are equally-valid nearest
    # picks; the tolerance scales with the bf16 rounding of y.
    y = jax.nn.gelu(x.astype(jnp.float32), approximate=False)
    same = out == ref
    near_tie = (jnp.abs(jnp.abs(y - out) - jnp.abs(y - ref))
                <= 1e-2 * (jnp.abs(y) + 0.0625))
    assert bool(jnp.all(same | near_tie)), float(jnp.max(jnp.abs(out - ref)))

    print("KERNEL_OK")
</pallas_src>

<mosaic_0001>
module attributes {stable_mosaic.version = 11 : i64} {
  func.func @kernel(%arg0: i32, %arg1: memref<64xf32, #tpu.memory_space<smem>>, %arg2: memref<63xf32, #tpu.memory_space<smem>>, %arg3: memref<8x128xf32, #tpu.memory_space<vmem>>, %arg4: memref<8x128xf32, #tpu.memory_space<vmem>>) attributes {dimension_semantics = [#tpu.dimension_semantics<parallel>], iteration_bounds = array<i64: 2>, scalar_prefetch = 0 : i64, scratch_operands = 0 : i64, tpu.core_type = #tpu.core_type<tc>, window_params = [{transform_indices = @transform_0, window_bounds = array<i64: 64>}, {transform_indices = @transform_1, window_bounds = array<i64: 63>}, {transform_indices = @transform_2, window_bounds = array<i64: 8, 128>}, {transform_indices = @transform_3, window_bounds = array<i64: 8, 128>}]} {
    %c0 = arith.constant 0 : index
    %c0_0 = arith.constant 0 : index
    %0 = vector.load %arg3[%c0, %c0_0] : memref<8x128xf32, #tpu.memory_space<vmem>>, vector<8x128xf32>
    %1 = math.absf %0 : vector<8x128xf32>
    %cst = arith.constant 0.707106769 : f32
    %2 = vector.broadcast %cst : f32 to vector<8x128xf32>
    %3 = arith.mulf %1, %2 : vector<8x128xf32>
    %cst_1 = arith.constant 0.327591091 : f32
    %4 = vector.broadcast %cst_1 : f32 to vector<8x128xf32>
    %5 = arith.mulf %4, %3 : vector<8x128xf32>
    %cst_2 = arith.constant 1.000000e+00 : f32
    %6 = vector.broadcast %cst_2 : f32 to vector<8x128xf32>
    %7 = arith.addf %6, %5 : vector<8x128xf32>
    %8 = tpu.reciprocal %7 {approx = true} : vector<8x128xf32> -> vector<8x128xf32>
    %cst_3 = arith.constant 1.06140542 : f32
    %9 = vector.broadcast %cst_3 : f32 to vector<8x128xf32>
    %10 = arith.mulf %8, %9 : vector<8x128xf32>
    %cst_4 = arith.constant -1.45315206 : f32
    %11 = vector.broadcast %cst_4 : f32 to vector<8x128xf32>
    %12 = arith.addf %11, %10 : vector<8x128xf32>
    %13 = arith.mulf %8, %12 : vector<8x128xf32>
    %cst_5 = arith.constant 1.42141378 : f32
    %14 = vector.broadcast %cst_5 : f32 to vector<8x128xf32>
    %15 = arith.addf %14, %13 : vector<8x128xf32>
    %16 = arith.mulf %8, %15 : vector<8x128xf32>
    %cst_6 = arith.constant -0.284496725 : f32
    %17 = vector.broadcast %cst_6 : f32 to vector<8x128xf32>
    %18 = arith.addf %17, %16 : vector<8x128xf32>
    %19 = arith.mulf %8, %18 : vector<8x128xf32>
    %cst_7 = arith.constant 0.254829586 : f32
    %20 = vector.broadcast %cst_7 : f32 to vector<8x128xf32>
    %21 = arith.addf %20, %19 : vector<8x128xf32>
    %22 = arith.mulf %8, %21 : vector<8x128xf32>
    %23 = arith.mulf %3, %3 : vector<8x128xf32>
    %cst_8 = arith.constant 0.000000e+00 : f32
    %24 = vector.broadcast %cst_8 : f32 to vector<8x128xf32>
    %25 = arith.subf %24, %23 : vector<8x128xf32>
    %26 = math.exp %25 : vector<8x128xf32>
    %27 = arith.mulf %22, %26 : vector<8x128xf32>
    %cst_9 = arith.constant 1.000000e+00 : f32
    %28 = vector.broadcast %cst_9 : f32 to vector<8x128xf32>
    %29 = arith.subf %28, %27 : vector<8x128xf32>
    %30 = arith.mulf %1, %29 : vector<8x128xf32>
    %31 = arith.addf %0, %30 : vector<8x128xf32>
    %cst_10 = arith.constant 5.000000e-01 : f32
    %32 = vector.broadcast %cst_10 : f32 to vector<8x128xf32>
    %33 = arith.mulf %32, %31 : vector<8x128xf32>
    %c0_11 = arith.constant 0 : index
    %34 = memref.load %arg1[%c0_11] : memref<64xf32, #tpu.memory_space<smem>>
    %35 = vector.broadcast %34 : f32 to vector<8x128xf32>
    %c0_12 = arith.constant 0 : index
    %36 = memref.load %arg2[%c0_12] : memref<63xf32, #tpu.memory_space<smem>>
    %c1 = arith.constant 1 : index
    %37 = memref.load %arg1[%c1] : memref<64xf32, #tpu.memory_space<smem>>
    %38 = vector.broadcast %36 : f32 to vector<8x128xf32>
    %39 = arith.cmpf ogt, %33, %38 : vector<8x128xf32>
    %40 = vector.broadcast %37 : f32 to vector<8x128xf32>
    %41 = arith.select %39, %40, %35 : vector<8x128xi1>, vector<8x128xf32>
    %c1_13 = arith.constant 1 : index
    %42 = memref.load %arg2[%c1_13] : memref<63xf32, #tpu.memory_space<smem>>
    %c2 = arith.constant 2 : index
    %43 = memref.load %arg1[%c2] : memref<64xf32, #tpu.memory_space<smem>>
    %44 = vector.broadcast %42 : f32 to vector<8x128xf32>
    %45 = arith.cmpf ogt, %33, %44 : vector<8x128xf32>
    %46 = vector.broadcast %43 : f32 to vector<8x128xf32>
    %47 = arith.select %45, %46, %41 : vector<8x128xi1>, vector<8x128xf32>
    %c2_14 = arith.constant 2 : index
    %48 = memref.load %arg2[%c2_14] : memref<63xf32, #tpu.memory_space<smem>>
    %c3 = arith.constant 3 : index
    %49 = memref.load %arg1[%c3] : memref<64xf32, #tpu.memory_space<smem>>
    %50 = vector.broadcast %48 : f32 to vector<8x128xf32>
    %51 = arith.cmpf ogt, %33, %50 : vector<8x128xf32>
    %52 = vector.broadcast %49 : f32 to vector<8x128xf32>
    %53 = arith.select %51, %52, %47 : vector<8x128xi1>, vector<8x128xf32>
    %c3_15 = arith.constant 3 : index
    %54 = memref.load %arg2[%c3_15] : memref<63xf32, #tpu.memory_space<smem>>
    %c4 = arith.constant 4 : index
    %55 = memref.load %arg1[%c4] : memref<64xf32, #tpu.memory_space<smem>>
    %56 = vector.broadcast %54 : f32 to vector<8x128xf32>
    %57 = arith.cmpf ogt, %33, %56 : vector<8x128xf32>
    %58 = vector.broadcast %55 : f32 to vector<8x128xf32>
    %59 = arith.select %57, %58, %53 : vector<8x128xi1>, vector<8x128xf32>
    %c4_16 = arith.constant 4 : index
    %60 = memref.load %arg2[%c4_16] : memref<63xf32, #tpu.memory_space<smem>>
    %c5 = arith.constant 5 : index
    %61 = memref.load %arg1[%c5] : memref<64xf32, #tpu.memory_space<smem>>
    %62 = vector.broadcast %60 : f32 to vector<8x128xf32>
    %63 = arith.cmpf ogt, %33, %62 : vector<8x128xf32>
    %64 = vector.broadcast %61 : f32 to vector<8x128xf32>
    %65 = arith.select %63, %64, %59 : vector<8x128xi1>, vector<8x128xf32>
    %c5_17 = arith.constant 5 : index
    %66 = memref.load %arg2[%c5_17] : memref<63xf32, #tpu.memory_space<smem>>
    %c6 = arith.constant 6 : index
    %67 = memref.load %arg1[%c6] : memref<64xf32, #tpu.memory_space<smem>>
    %68 = vector.broadcast %66 : f32 to vector<8x128xf32>
    %69 = arith.cmpf ogt, %33, %68 : vector<8x128xf32>
    %70 = vector.broadcast %67 : f32 to vector<8x128xf32>
    %71 = arith.select %69, %70, %65 : vector<8x128xi1>, vector<8x128xf32>
    %c6_18 = arith.constant 6 : index
    %72 = memref.load %arg2[%c6_18] : memref<63xf32, #tpu.memory_space<smem>>
    %c7 = arith.constant 7 : index
    %73 = memref.load %arg1[%c7] : memref<64xf32, #tpu.memory_space<smem>>
    %74 = vector.broadcast %72 : f32 to vector<8x128xf32>
    %75 = arith.cmpf ogt, %33, %74 : vector<8x128xf32>
    %76 = vector.broadcast %73 : f32 to vector<8x128xf32>
    %77 = arith.select %75, %76, %71 : vector<8x128xi1>, vector<8x128xf32>
    %c7_19 = arith.constant 7 : index
    %78 = memref.load %arg2[%c7_19] : memref<63xf32, #tpu.memory_space<smem>>
    %c8 = arith.constant 8 : index
    %79 = memref.load %arg1[%c8] : memref<64xf32, #tpu.memory_space<smem>>
    %80 = vector.broadcast %78 : f32 to vector<8x128xf32>
    %81 = arith.cmpf ogt, %33, %80 : vector<8x128xf32>
    %82 = vector.broadcast %79 : f32 to vector<8x128xf32>
    %83 = arith.select %81, %82, %77 : vector<8x128xi1>, vector<8x128xf32>
    %c8_20 = arith.constant 8 : index
    %84 = memref.load %arg2[%c8_20] : memref<63xf32, #tpu.memory_space<smem>>
    %c9 = arith.constant 9 : index
    %85 = memref.load %arg1[%c9] : memref<64xf32, #tpu.memory_space<smem>>
    %86 = vector.broadcast %84 : f32 to vector<8x128xf32>
    %87 = arith.cmpf ogt, %33, %86 : vector<8x128xf32>
    %88 = vector.broadcast %85 : f32 to vector<8x128xf32>
    %89 = arith.select %87, %88, %83 : vector<8x128xi1>, vector<8x128xf32>
    %c9_21 = arith.constant 9 : index
    %90 = memref.load %arg2[%c9_21] : memref<63xf32, #tpu.memory_space<smem>>
    %c10 = arith.constant 10 : index
    %91 = memref.load %arg1[%c10] : memref<64xf32, #tpu.memory_space<smem>>
    %92 = vector.broadcast %90 : f32 to vector<8x128xf32>
    %93 = arith.cmpf ogt, %33, %92 : vector<8x128xf32>
    %94 = vector.broadcast %91 : f32 to vector<8x128xf32>
    %95 = arith.select %93, %94, %89 : vector<8x128xi1>, vector<8x128xf32>
    %c10_22 = arith.constant 10 : index
    %96 = memref.load %arg2[%c10_22] : memref<63xf32, #tpu.memory_space<smem>>
    %c11 = arith.constant 11 : index
    %97 = memref.load %arg1[%c11] : memref<64xf32, #tpu.memory_space<smem>>
    %98 = vector.broadcast %96 : f32 to vector<8x128xf32>
    %99 = arith.cmpf ogt, %33, %98 : vector<8x128xf32>
    %100 = vector.broadcast %97 : f32 to vector<8x128xf32>
    %101 = arith.select %99, %100, %95 : vector<8x128xi1>, vector<8x128xf32>
    %c11_23 = arith.constant 11 : index
    %102 = memref.load %arg2[%c11_23] : memref<63xf32, #tpu.memory_space<smem>>
    %c12 = arith.constant 12 : index
    %103 = memref.load %arg1[%c12] : memref<64xf32, #tpu.memory_space<smem>>
    %104 = vector.broadcast %102 : f32 to vector<8x128xf32>
    %105 = arith.cmpf ogt, %33, %104 : vector<8x128xf32>
    %106 = vector.broadcast %103 : f32 to vector<8x128xf32>
    %107 = arith.select %105, %106, %101 : vector<8x128xi1>, vector<8x128xf32>
    %c12_24 = arith.constant 12 : index
    %108 = memref.load %arg2[%c12_24] : memref<63xf32, #tpu.memory_space<smem>>
    %c13 = arith.constant 13 : index
    %109 = memref.load %arg1[%c13] : memref<64xf32, #tpu.memory_space<smem>>
    %110 = vector.broadcast %108 : f32 to vector<8x128xf32>
    %111 = arith.cmpf ogt, %33, %110 : vector<8x128xf32>
    %112 = vector.broadcast %109 : f32 to vector<8x128xf32>
    %113 = arith.select %111, %112, %107 : vector<8x128xi1>, vector<8x128xf32>
    %c13_25 = arith.constant 13 : index
    %114 = memref.load %arg2[%c13_25] : memref<63xf32, #tpu.memory_space<smem>>
    %c14 = arith.constant 14 : index
    %115 = memref.load %arg1[%c14] : memref<64xf32, #tpu.memory_space<smem>>
    %116 = vector.broadcast %114 : f32 to vector<8x128xf32>
    %117 = arith.cmpf ogt, %33, %116 : vector<8x128xf32>
    %118 = vector.broadcast %115 : f32 to vector<8x128xf32>
    %119 = arith.select %117, %118, %113 : vector<8x128xi1>, vector<8x128xf32>
    %c14_26 = arith.constant 14 : index
    %120 = memref.load %arg2[%c14_26] : memref<63xf32, #tpu.memory_space<smem>>
    %c15 = arith.constant 15 : index
    %121 = memref.load %arg1[%c15] : memref<64xf32, #tpu.memory_space<smem>>
    %122 = vector.broadcast %120 : f32 to vector<8x128xf32>
    %123 = arith.cmpf ogt, %33, %122 : vector<8x128xf32>
    %124 = vector.broadcast %121 : f32 to vector<8x128xf32>
    %125 = arith.select %123, %124, %119 : vector<8x128xi1>, vector<8x128xf32>
    %c15_27 = arith.constant 15 : index
    %126 = memref.load %arg2[%c15_27] : memref<63xf32, #tpu.memory_space<smem>>
    %c16 = arith.constant 16 : index
    %127 = memref.load %arg1[%c16] : memref<64xf32, #tpu.memory_space<smem>>
    %128 = vector.broadcast %126 : f32 to vector<8x128xf32>
    %129 = arith.cmpf ogt, %33, %128 : vector<8x128xf32>
    %130 = vector.broadcast %127 : f32 to vector<8x128xf32>
    %131 = arith.select %129, %130, %125 : vector<8x128xi1>, vector<8x128xf32>
    %c16_28 = arith.constant 16 : index
    %132 = memref.load %arg2[%c16_28] : memref<63xf32, #tpu.memory_space<smem>>
    %c17 = arith.constant 17 : index
    %133 = memref.load %arg1[%c17] : memref<64xf32, #tpu.memory_space<smem>>
    %134 = vector.broadcast %132 : f32 to vector<8x128xf32>
    %135 = arith.cmpf ogt, %33, %134 : vector<8x128xf32>
    %136 = vector.broadcast %133 : f32 to vector<8x128xf32>
    %137 = arith.select %135, %136, %131 : vector<8x128xi1>, vector<8x128xf32>
    %c17_29 = arith.constant 17 : index
    %138 = memref.load %arg2[%c17_29] : memref<63xf32, #tpu.memory_space<smem>>
    %c18 = arith.constant 18 : index
    %139 = memref.load %arg1[%c18] : memref<64xf32, #tpu.memory_space<smem>>
    %140 = vector.broadcast %138 : f32 to vector<8x128xf32>
    %141 = arith.cmpf ogt, %33, %140 : vector<8x128xf32>
    %142 = vector.broadcast %139 : f32 to vector<8x128xf32>
    %143 = arith.select %141, %142, %137 : vector<8x128xi1>, vector<8x128xf32>
    %c18_30 = arith.constant 18 : index
    %144 = memref.load %arg2[%c18_30] : memref<63xf32, #tpu.memory_space<smem>>
    %c19 = arith.constant 19 : index
    %145 = memref.load %arg1[%c19] : memref<64xf32, #tpu.memory_space<smem>>
    %146 = vector.broadcast %144 : f32 to vector<8x128xf32>
    %147 = arith.cmpf ogt, %33, %146 : vector<8x128xf32>
    %148 = vector.broadcast %145 : f32 to vector<8x128xf32>
    %149 = arith.select %147, %148, %143 : vector<8x128xi1>, vector<8x128xf32>
    %c19_31 = arith.constant 19 : index
    %150 = memref.load %arg2[%c19_31] : memref<63xf32, #tpu.memory_space<smem>>
    %c20 = arith.constant 20 : index
    %151 = memref.load %arg1[%c20] : memref<64xf32, #tpu.memory_space<smem>>
    %152 = vector.broadcast %150 : f32 to vector<8x128xf32>
    %153 = arith.cmpf ogt, %33, %152 : vector<8x128xf32>
    %154 = vector.broadcast %151 : f32 to vector<8x128xf32>
    %155 = arith.select %153, %154, %149 : vector<8x128xi1>, vector<8x128xf32>
    %c20_32 = arith.constant 20 : index
    %156 = memref.load %arg2[%c20_32] : memref<63xf32, #tpu.memory_space<smem>>
    %c21 = arith.constant 21 : index
    %157 = memref.load %arg1[%c21] : memref<64xf32, #tpu.memory_space<smem>>
    %158 = vector.broadcast %156 : f32 to vector<8x128xf32>
    %159 = arith.cmpf ogt, %33, %158 : vector<8x128xf32>
    %160 = vector.broadcast %157 : f32 to vector<8x128xf32>
    %161 = arith.select %159, %160, %155 : vector<8x128xi1>, vector<8x128xf32>
    %c21_33 = arith.constant 21 : index
    %162 = memref.load %arg2[%c21_33] : memref<63xf32, #tpu.memory_space<smem>>
    %c22 = arith.constant 22 : index
    %163 = memref.load %arg1[%c22] : memref<64xf32, #tpu.memory_space<smem>>
    %164 = vector.broadcast %162 : f32 to vector<8x128xf32>
    %165 = arith.cmpf ogt, %33, %164 : vector<8x128xf32>
    %166 = vector.broadcast %163 : f32 to vector<8x128xf32>
    %167 = arith.select %165, %166, %161 : vector<8x128xi1>, vector<8x128xf32>
    %c22_34 = arith.constant 22 : index
    %168 = memref.load %arg2[%c22_34] : memref<63xf32, #tpu.memory_space<smem>>
    %c23 = arith.constant 23 : index
    %169 = memref.load %arg1[%c23] : memref<64xf32, #tpu.memory_space<smem>>
    %170 = vector.broadcast %168 : f32 to vector<8x128xf32>
    %171 = arith.cmpf ogt, %33, %170 : vector<8x128xf32>
    %172 = vector.broadcast %169 : f32 to vector<8x128xf32>
    %173 = arith.select %171, %172, %167 : vector<8x128xi1>, vector<8x128xf32>
    %c23_35 = arith.constant 23 : index
    %174 = memref.load %arg2[%c23_35] : memref<63xf32, #tpu.memory_space<smem>>
    %c24 = arith.constant 24 : index
    %175 = memref.load %arg1[%c24] : memref<64xf32, #tpu.memory_space<smem>>
    %176 = vector.broadcast %174 : f32 to vector<8x128xf32>
    %177 = arith.cmpf ogt, %33, %176 : vector<8x128xf32>
    %178 = vector.broadcast %175 : f32 to vector<8x128xf32>
    %179 = arith.select %177, %178, %173 : vector<8x128xi1>, vector<8x128xf32>
    %c24_36 = arith.constant 24 : index
    %180 = memref.load %arg2[%c24_36] : memref<63xf32, #tpu.memory_space<smem>>
    %c25 = arith.constant 25 : index
    %181 = memref.load %arg1[%c25] : memref<64xf32, #tpu.memory_space<smem>>
    %182 = vector.broadcast %180 : f32 to vector<8x128xf32>
    %183 = arith.cmpf ogt, %33, %182 : vector<8x128xf32>
    %184 = vector.broadcast %181 : f32 to vector<8x128xf32>
    %185 = arith.select %183, %184, %179 : vector<8x128xi1>, vector<8x128xf32>
    %c25_37 = arith.constant 25 : index
    %186 = memref.load %arg2[%c25_37] : memref<63xf32, #tpu.memory_space<smem>>
    %c26 = arith.constant 26 : index
    %187 = memref.load %arg1[%c26] : memref<64xf32, #tpu.memory_space<smem>>
    %188 = vector.broadcast %186 : f32 to vector<8x128xf32>
    %189 = arith.cmpf ogt, %33, %188 : vector<8x128xf32>
    %190 = vector.broadcast %187 : f32 to vector<8x128xf32>
    %191 = arith.select %189, %190, %185 : vector<8x128xi1>, vector<8x128xf32>
    %c26_38 = arith.constant 26 : index
    %192 = memref.load %arg2[%c26_38] : memref<63xf32, #tpu.memory_space<smem>>
    %c27 = arith.constant 27 : index
    %193 = memref.load %arg1[%c27] : memref<64xf32, #tpu.memory_space<smem>>
    %194 = vector.broadcast %192 : f32 to vector<8x128xf32>
    %195 = arith.cmpf ogt, %33, %194 : vector<8x128xf32>
    %196 = vector.broadcast %193 : f32 to vector<8x128xf32>
    %197 = arith.select %195, %196, %191 : vector<8x128xi1>, vector<8x128xf32>
    %c27_39 = arith.constant 27 : index
    %198 = memref.load %arg2[%c27_39] : memref<63xf32, #tpu.memory_space<smem>>
    %c28 = arith.constant 28 : index
    %199 = memref.load %arg1[%c28] : memref<64xf32, #tpu.memory_space<smem>>
    %200 = vector.broadcast %198 : f32 to vector<8x128xf32>
    %201 = arith.cmpf ogt, %33, %200 : vector<8x128xf32>
    %202 = vector.broadcast %199 : f32 to vector<8x128xf32>
    %203 = arith.select %201, %202, %197 : vector<8x128xi1>, vector<8x128xf32>
    %c28_40 = arith.constant 28 : index
    %204 = memref.load %arg2[%c28_40] : memref<63xf32, #tpu.memory_space<smem>>
    %c29 = arith.constant 29 : index
    %205 = memref.load %arg1[%c29] : memref<64xf32, #tpu.memory_space<smem>>
    %206 = vector.broadcast %204 : f32 to vector<8x128xf32>
    %207 = arith.cmpf ogt, %33, %206 : vector<8x128xf32>
    %208 = vector.broadcast %205 : f32 to vector<8x128xf32>
    %209 = arith.select %207, %208, %203 : vector<8x128xi1>, vector<8x128xf32>
    %c29_41 = arith.constant 29 : index
    %210 = memref.load %arg2[%c29_41] : memref<63xf32, #tpu.memory_space<smem>>
    %c30 = arith.constant 30 : index
    %211 = memref.load %arg1[%c30] : memref<64xf32, #tpu.memory_space<smem>>
    %212 = vector.broadcast %210 : f32 to vector<8x128xf32>
    %213 = arith.cmpf ogt, %33, %212 : vector<8x128xf32>
    %214 = vector.broadcast %211 : f32 to vector<8x128xf32>
    %215 = arith.select %213, %214, %209 : vector<8x128xi1>, vector<8x128xf32>
    %c30_42 = arith.constant 30 : index
    %216 = memref.load %arg2[%c30_42] : memref<63xf32, #tpu.memory_space<smem>>
    %c31 = arith.constant 31 : index
    %217 = memref.load %arg1[%c31] : memref<64xf32, #tpu.memory_space<smem>>
    %218 = vector.broadcast %216 : f32 to vector<8x128xf32>
    %219 = arith.cmpf ogt, %33, %218 : vector<8x128xf32>
    %220 = vector.broadcast %217 : f32 to vector<8x128xf32>
    %221 = arith.select %219, %220, %215 : vector<8x128xi1>, vector<8x128xf32>
    %c31_43 = arith.constant 31 : index
    %222 = memref.load %arg2[%c31_43] : memref<63xf32, #tpu.memory_space<smem>>
    %c32 = arith.constant 32 : index
    %223 = memref.load %arg1[%c32] : memref<64xf32, #tpu.memory_space<smem>>
    %224 = vector.broadcast %222 : f32 to vector<8x128xf32>
    %225 = arith.cmpf ogt, %33, %224 : vector<8x128xf32>
    %226 = vector.broadcast %223 : f32 to vector<8x128xf32>
    %227 = arith.select %225, %226, %221 : vector<8x128xi1>, vector<8x128xf32>
    %c32_44 = arith.constant 32 : index
    %228 = memref.load %arg2[%c32_44] : memref<63xf32, #tpu.memory_space<smem>>
    %c33 = arith.constant 33 : index
    %229 = memref.load %arg1[%c33] : memref<64xf32, #tpu.memory_space<smem>>
    %230 = vector.broadcast %228 : f32 to vector<8x128xf32>
    %231 = arith.cmpf ogt, %33, %230 : vector<8x128xf32>
    %232 = vector.broadcast %229 : f32 to vector<8x128xf32>
    %233 = arith.select %231, %232, %227 : vector<8x128xi1>, vector<8x128xf32>
    %c33_45 = arith.constant 33 : index
    %234 = memref.load %arg2[%c33_45] : memref<63xf32, #tpu.memory_space<smem>>
    %c34 = arith.constant 34 : index
    %235 = memref.load %arg1[%c34] : memref<64xf32, #tpu.memory_space<smem>>
    %236 = vector.broadcast %234 : f32 to vector<8x128xf32>
    %237 = arith.cmpf ogt, %33, %236 : vector<8x128xf32>
    %238 = vector.broadcast %235 : f32 to vector<8x128xf32>
    %239 = arith.select %237, %238, %233 : vector<8x128xi1>, vector<8x128xf32>
    %c34_46 = arith.constant 34 : index
    %240 = memref.load %arg2[%c34_46] : memref<63xf32, #tpu.memory_space<smem>>
    %c35 = arith.constant 35 : index
    %241 = memref.load %arg1[%c35] : memref<64xf32, #tpu.memory_space<smem>>
    %242 = vector.broadcast %240 : f32 to vector<8x128xf32>
    %243 = arith.cmpf ogt, %33, %242 : vector<8x128xf32>
    %244 = vector.broadcast %241 : f32 to vector<8x128xf32>
    %245 = arith.select %243, %244, %239 : vector<8x128xi1>, vector<8x128xf32>
    %c35_47 = arith.constant 35 : index
    %246 = memref.load %arg2[%c35_47] : memref<63xf32, #tpu.memory_space<smem>>
    %c36 = arith.constant 36 : index
    %247 = memref.load %arg1[%c36] : memref<64xf32, #tpu.memory_space<smem>>
    %248 = vector.broadcast %246 : f32 to vector<8x128xf32>
    %249 = arith.cmpf ogt, %33, %248 : vector<8x128xf32>
    %250 = vector.broadcast %247 : f32 to vector<8x128xf32>
    %251 = arith.select %249, %250, %245 : vector<8x128xi1>, vector<8x128xf32>
    %c36_48 = arith.constant 36 : index
    %252 = memref.load %arg2[%c36_48] : memref<63xf32, #tpu.memory_space<smem>>
    %c37 = arith.constant 37 : index
    %253 = memref.load %arg1[%c37] : memref<64xf32, #tpu.memory_space<smem>>
    %254 = vector.broadcast %252 : f32 to vector<8x128xf32>
    %255 = arith.cmpf ogt, %33, %254 : vector<8x128xf32>
    %256 = vector.broadcast %253 : f32 to vector<8x128xf32>
    %257 = arith.select %255, %256, %251 : vector<8x128xi1>, vector<8x128xf32>
    %c37_49 = arith.constant 37 : index
    %258 = memref.load %arg2[%c37_49] : memref<63xf32, #tpu.memory_space<smem>>
    %c38 = arith.constant 38 : index
    %259 = memref.load %arg1[%c38] : memref<64xf32, #tpu.memory_space<smem>>
    %260 = vector.broadcast %258 : f32 to vector<8x128xf32>
    %261 = arith.cmpf ogt, %33, %260 : vector<8x128xf32>
    %262 = vector.broadcast %259 : f32 to vector<8x128xf32>
    %263 = arith.select %261, %262, %257 : vector<8x128xi1>, vector<8x128xf32>
    %c38_50 = arith.constant 38 : index
    %264 = memref.load %arg2[%c38_50] : memref<63xf32, #tpu.memory_space<smem>>
    %c39 = arith.constant 39 : index
    %265 = memref.load %arg1[%c39] : memref<64xf32, #tpu.memory_space<smem>>
    %266 = vector.broadcast %264 : f32 to vector<8x128xf32>
    %267 = arith.cmpf ogt, %33, %266 : vector<8x128xf32>
    %268 = vector.broadcast %265 : f32 to vector<8x128xf32>
    %269 = arith.select %267, %268, %263 : vector<8x128xi1>, vector<8x128xf32>
    %c39_51 = arith.constant 39 : index
    %270 = memref.load %arg2[%c39_51] : memref<63xf32, #tpu.memory_space<smem>>
    %c40 = arith.constant 40 : index
    %271 = memref.load %arg1[%c40] : memref<64xf32, #tpu.memory_space<smem>>
    %272 = vector.broadcast %270 : f32 to vector<8x128xf32>
    %273 = arith.cmpf ogt, %33, %272 : vector<8x128xf32>
    %274 = vector.broadcast %271 : f32 to vector<8x128xf32>
    %275 = arith.select %273, %274, %269 : vector<8x128xi1>, vector<8x128xf32>
    %c40_52 = arith.constant 40 : index
    %276 = memref.load %arg2[%c40_52] : memref<63xf32, #tpu.memory_space<smem>>
    %c41 = arith.constant 41 : index
    %277 = memref.load %arg1[%c41] : memref<64xf32, #tpu.memory_space<smem>>
    %278 = vector.broadcast %276 : f32 to vector<8x128xf32>
    %279 = arith.cmpf ogt, %33, %278 : vector<8x128xf32>
    %280 = vector.broadcast %277 : f32 to vector<8x128xf32>
    %281 = arith.select %279, %280, %275 : vector<8x128xi1>, vector<8x128xf32>
    %c41_53 = arith.constant 41 : index
    %282 = memref.load %arg2[%c41_53] : memref<63xf32, #tpu.memory_space<smem>>
    %c42 = arith.constant 42 : index
    %283 = memref.load %arg1[%c42] : memref<64xf32, #tpu.memory_space<smem>>
    %284 = vector.broadcast %282 : f32 to vector<8x128xf32>
    %285 = arith.cmpf ogt, %33, %284 : vector<8x128xf32>
    %286 = vector.broadcast %283 : f32 to vector<8x128xf32>
    %287 = arith.select %285, %286, %281 : vector<8x128xi1>, vector<8x128xf32>
    %c42_54 = arith.constant 42 : index
    %288 = memref.load %arg2[%c42_54] : memref<63xf32, #tpu.memory_space<smem>>
    %c43 = arith.constant 43 : index
    %289 = memref.load %arg1[%c43] : memref<64xf32, #tpu.memory_space<smem>>
    %290 = vector.broadcast %288 : f32 to vector<8x128xf32>
    %291 = arith.cmpf ogt, %33, %290 : vector<8x128xf32>
    %292 = vector.broadcast %289 : f32 to vector<8x128xf32>
    %293 = arith.select %291, %292, %287 : vector<8x128xi1>, vector<8x128xf32>
    %c43_55 = arith.constant 43 : index
    %294 = memref.load %arg2[%c43_55] : memref<63xf32, #tpu.memory_space<smem>>
    %c44 = arith.constant 44 : index
    %295 = memref.load %arg1[%c44] : memref<64xf32, #tpu.memory_space<smem>>
    %296 = vector.broadcast %294 : f32 to vector<8x128xf32>
    %297 = arith.cmpf ogt, %33, %296 : vector<8x128xf32>
    %298 = vector.broadcast %295 : f32 to vector<8x128xf32>
    %299 = arith.select %297, %298, %293 : vector<8x128xi1>, vector<8x128xf32>
    %c44_56 = arith.constant 44 : index
    %300 = memref.load %arg2[%c44_56] : memref<63xf32, #tpu.memory_space<smem>>
    %c45 = arith.constant 45 : index
    %301 = memref.load %arg1[%c45] : memref<64xf32, #tpu.memory_space<smem>>
    %302 = vector.broadcast %300 : f32 to vector<8x128xf32>
    %303 = arith.cmpf ogt, %33, %302 : vector<8x128xf32>
    %304 = vector.broadcast %301 : f32 to vector<8x128xf32>
    %305 = arith.select %303, %304, %299 : vector<8x128xi1>, vector<8x128xf32>
    %c45_57 = arith.constant 45 : index
    %306 = memref.load %arg2[%c45_57] : memref<63xf32, #tpu.memory_space<smem>>
    %c46 = arith.constant 46 : index
    %307 = memref.load %arg1[%c46] : memref<64xf32, #tpu.memory_space<smem>>
    %308 = vector.broadcast %306 : f32 to vector<8x128xf32>
    %309 = arith.cmpf ogt, %33, %308 : vector<8x128xf32>
    %310 = vector.broadcast %307 : f32 to vector<8x128xf32>
    %311 = arith.select %309, %310, %305 : vector<8x128xi1>, vector<8x128xf32>
    %c46_58 = arith.constant 46 : index
    %312 = memref.load %arg2[%c46_58] : memref<63xf32, #tpu.memory_space<smem>>
    %c47 = arith.constant 47 : index
    %313 = memref.load %arg1[%c47] : memref<64xf32, #tpu.memory_space<smem>>
    %314 = vector.broadcast %312 : f32 to vector<8x128xf32>
    %315 = arith.cmpf ogt, %33, %314 : vector<8x128xf32>
    %316 = vector.broadcast %313 : f32 to vector<8x128xf32>
    %317 = arith.select %315, %316, %311 : vector<8x128xi1>, vector<8x128xf32>
    %c47_59 = arith.constant 47 : index
    %318 = memref.load %arg2[%c47_59] : memref<63xf32, #tpu.memory_space<smem>>
    %c48 = arith.constant 48 : index
    %319 = memref.load %arg1[%c48] : memref<64xf32, #tpu.memory_space<smem>>
    %320 = vector.broadcast %318 : f32 to vector<8x128xf32>
    %321 = arith.cmpf ogt, %33, %320 : vector<8x128xf32>
    %322 = vector.broadcast %319 : f32 to vector<8x128xf32>
    %323 = arith.select %321, %322, %317 : vector<8x128xi1>, vector<8x128xf32>
    %c48_60 = arith.constant 48 : index
    %324 = memref.load %arg2[%c48_60] : memref<63xf32, #tpu.memory_space<smem>>
    %c49 = arith.constant 49 : index
    %325 = memref.load %arg1[%c49] : memref<64xf32, #tpu.memory_space<smem>>
    %326 = vector.broadcast %324 : f32 to vector<8x128xf32>
    %327 = arith.cmpf ogt, %33, %326 : vector<8x128xf32>
    %328 = vector.broadcast %325 : f32 to vector<8x128xf32>
    %329 = arith.select %327, %328, %323 : vector<8x128xi1>, vector<8x128xf32>
    %c49_61 = arith.constant 49 : index
    %330 = memref.load %arg2[%c49_61] : memref<63xf32, #tpu.memory_space<smem>>
    %c50 = arith.constant 50 : index
    %331 = memref.load %arg1[%c50] : memref<64xf32, #tpu.memory_space<smem>>
    %332 = vector.broadcast %330 : f32 to vector<8x128xf32>
    %333 = arith.cmpf ogt, %33, %332 : vector<8x128xf32>
    %334 = vector.broadcast %331 : f32 to vector<8x128xf32>
    %335 = arith.select %333, %334, %329 : vector<8x128xi1>, vector<8x128xf32>
    %c50_62 = arith.constant 50 : index
    %336 = memref.load %arg2[%c50_62] : memref<63xf32, #tpu.memory_space<smem>>
    %c51 = arith.constant 51 : index
    %337 = memref.load %arg1[%c51] : memref<64xf32, #tpu.memory_space<smem>>
    %338 = vector.broadcast %336 : f32 to vector<8x128xf32>
    %339 = arith.cmpf ogt, %33, %338 : vector<8x128xf32>
    %340 = vector.broadcast %337 : f32 to vector<8x128xf32>
    %341 = arith.select %339, %340, %335 : vector<8x128xi1>, vector<8x128xf32>
    %c51_63 = arith.constant 51 : index
    %342 = memref.load %arg2[%c51_63] : memref<63xf32, #tpu.memory_space<smem>>
    %c52 = arith.constant 52 : index
    %343 = memref.load %arg1[%c52] : memref<64xf32, #tpu.memory_space<smem>>
    %344 = vector.broadcast %342 : f32 to vector<8x128xf32>
    %345 = arith.cmpf ogt, %33, %344 : vector<8x128xf32>
    %346 = vector.broadcast %343 : f32 to vector<8x128xf32>
    %347 = arith.select %345, %346, %341 : vector<8x128xi1>, vector<8x128xf32>
    %c52_64 = arith.constant 52 : index
    %348 = memref.load %arg2[%c52_64] : memref<63xf32, #tpu.memory_space<smem>>
    %c53 = arith.constant 53 : index
    %349 = memref.load %arg1[%c53] : memref<64xf32, #tpu.memory_space<smem>>
    %350 = vector.broadcast %348 : f32 to vector<8x128xf32>
    %351 = arith.cmpf ogt, %33, %350 : vector<8x128xf32>
    %352 = vector.broadcast %349 : f32 to vector<8x128xf32>
    %353 = arith.select %351, %352, %347 : vector<8x128xi1>, vector<8x128xf32>
    %c53_65 = arith.constant 53 : index
    %354 = memref.load %arg2[%c53_65] : memref<63xf32, #tpu.memory_space<smem>>
    %c54 = arith.constant 54 : index
    %355 = memref.load %arg1[%c54] : memref<64xf32, #tpu.memory_space<smem>>
    %356 = vector.broadcast %354 : f32 to vector<8x128xf32>
    %357 = arith.cmpf ogt, %33, %356 : vector<8x128xf32>
    %358 = vector.broadcast %355 : f32 to vector<8x128xf32>
    %359 = arith.select %357, %358, %353 : vector<8x128xi1>, vector<8x128xf32>
    %c54_66 = arith.constant 54 : index
    %360 = memref.load %arg2[%c54_66] : memref<63xf32, #tpu.memory_space<smem>>
    %c55 = arith.constant 55 : index
    %361 = memref.load %arg1[%c55] : memref<64xf32, #tpu.memory_space<smem>>
    %362 = vector.broadcast %360 : f32 to vector<8x128xf32>
    %363 = arith.cmpf ogt, %33, %362 : vector<8x128xf32>
    %364 = vector.broadcast %361 : f32 to vector<8x128xf32>
    %365 = arith.select %363, %364, %359 : vector<8x128xi1>, vector<8x128xf32>
    %c55_67 = arith.constant 55 : index
    %366 = memref.load %arg2[%c55_67] : memref<63xf32, #tpu.memory_space<smem>>
    %c56 = arith.constant 56 : index
    %367 = memref.load %arg1[%c56] : memref<64xf32, #tpu.memory_space<smem>>
    %368 = vector.broadcast %366 : f32 to vector<8x128xf32>
    %369 = arith.cmpf ogt, %33, %368 : vector<8x128xf32>
    %370 = vector.broadcast %367 : f32 to vector<8x128xf32>
    %371 = arith.select %369, %370, %365 : vector<8x128xi1>, vector<8x128xf32>
    %c56_68 = arith.constant 56 : index
    %372 = memref.load %arg2[%c56_68] : memref<63xf32, #tpu.memory_space<smem>>
    %c57 = arith.constant 57 : index
    %373 = memref.load %arg1[%c57] : memref<64xf32, #tpu.memory_space<smem>>
    %374 = vector.broadcast %372 : f32 to vector<8x128xf32>
    %375 = arith.cmpf ogt, %33, %374 : vector<8x128xf32>
    %376 = vector.broadcast %373 : f32 to vector<8x128xf32>
    %377 = arith.select %375, %376, %371 : vector<8x128xi1>, vector<8x128xf32>
    %c57_69 = arith.constant 57 : index
    %378 = memref.load %arg2[%c57_69] : memref<63xf32, #tpu.memory_space<smem>>
    %c58 = arith.constant 58 : index
    %379 = memref.load %arg1[%c58] : memref<64xf32, #tpu.memory_space<smem>>
    %380 = vector.broadcast %378 : f32 to vector<8x128xf32>
    %381 = arith.cmpf ogt, %33, %380 : vector<8x128xf32>
    %382 = vector.broadcast %379 : f32 to vector<8x128xf32>
    %383 = arith.select %381, %382, %377 : vector<8x128xi1>, vector<8x128xf32>
    %c58_70 = arith.constant 58 : index
    %384 = memref.load %arg2[%c58_70] : memref<63xf32, #tpu.memory_space<smem>>
    %c59 = arith.constant 59 : index
    %385 = memref.load %arg1[%c59] : memref<64xf32, #tpu.memory_space<smem>>
    %386 = vector.broadcast %384 : f32 to vector<8x128xf32>
    %387 = arith.cmpf ogt, %33, %386 : vector<8x128xf32>
    %388 = vector.broadcast %385 : f32 to vector<8x128xf32>
    %389 = arith.select %387, %388, %383 : vector<8x128xi1>, vector<8x128xf32>
    %c59_71 = arith.constant 59 : index
    %390 = memref.load %arg2[%c59_71] : memref<63xf32, #tpu.memory_space<smem>>
    %c60 = arith.constant 60 : index
    %391 = memref.load %arg1[%c60] : memref<64xf32, #tpu.memory_space<smem>>
    %392 = vector.broadcast %390 : f32 to vector<8x128xf32>
    %393 = arith.cmpf ogt, %33, %392 : vector<8x128xf32>
    %394 = vector.broadcast %391 : f32 to vector<8x128xf32>
    %395 = arith.select %393, %394, %389 : vector<8x128xi1>, vector<8x128xf32>
    %c60_72 = arith.constant 60 : index
    %396 = memref.load %arg2[%c60_72] : memref<63xf32, #tpu.memory_space<smem>>
    %c61 = arith.constant 61 : index
    %397 = memref.load %arg1[%c61] : memref<64xf32, #tpu.memory_space<smem>>
    %398 = vector.broadcast %396 : f32 to vector<8x128xf32>
    %399 = arith.cmpf ogt, %33, %398 : vector<8x128xf32>
    %400 = vector.broadcast %397 : f32 to vector<8x128xf32>
    %401 = arith.select %399, %400, %395 : vector<8x128xi1>, vector<8x128xf32>
    %c61_73 = arith.constant 61 : index
    %402 = memref.load %arg2[%c61_73] : memref<63xf32, #tpu.memory_space<smem>>
    %c62 = arith.constant 62 : index
    %403 = memref.load %arg1[%c62] : memref<64xf32, #tpu.memory_space<smem>>
    %404 = vector.broadcast %402 : f32 to vector<8x128xf32>
    %405 = arith.cmpf ogt, %33, %404 : vector<8x128xf32>
    %406 = vector.broadcast %403 : f32 to vector<8x128xf32>
    %407 = arith.select %405, %406, %401 : vector<8x128xi1>, vector<8x128xf32>
    %c62_74 = arith.constant 62 : index
    %408 = memref.load %arg2[%c62_74] : memref<63xf32, #tpu.memory_space<smem>>
    %c63 = arith.constant 63 : index
    %409 = memref.load %arg1[%c63] : memref<64xf32, #tpu.memory_space<smem>>
    %410 = vector.broadcast %408 : f32 to vector<8x128xf32>
    %411 = arith.cmpf ogt, %33, %410 : vector<8x128xf32>
    %412 = vector.broadcast %409 : f32 to vector<8x128xf32>
    %413 = arith.select %411, %412, %407 : vector<8x128xi1>, vector<8x128xf32>
    %c0_75 = arith.constant 0 : index
    %c0_76 = arith.constant 0 : index
    %414 = vector.load %arg4[%c0_75, %c0_76] : memref<8x128xf32, #tpu.memory_space<vmem>>, vector<8x128xf32>
    tpu.vector_store %arg4[%c0_75, %c0_76], %413 {strides = array<i32>} : memref<8x128xf32, #tpu.memory_space<vmem>>, vector<8x128xf32>,
    return
  }
  func.func @transform_0(%arg0: i32) -> i32 {
    %c0_i32 = arith.constant 0 : i32
    %c0_i32_0 = arith.constant 0 : i32
    return %c0_i32 : i32
  }
  func.func @transform_1(%arg0: i32) -> i32 {
    %c0_i32 = arith.constant 0 : i32
    %c0_i32_0 = arith.constant 0 : i32
    return %c0_i32 : i32
  }
  func.func @transform_2(%arg0: i32) -> (i32, i32) {
    %c0_i32 = arith.constant 0 : i32
    %c0_i32_0 = arith.constant 0 : i32
    return %arg0, %c0_i32 : i32, i32
  }
  func.func @transform_3(%arg0: i32) -> (i32, i32) {
    %c0_i32 = arith.constant 0 : i32
    %c0_i32_0 = arith.constant 0 : i32
    return %arg0, %c0_i32 : i32, i32
  }
}

</mosaic_0001>

<llo_original>
// kernel: tpu_custom_call.1
$region0: #{tpu_custom_call.1}
  #allocation0 [shape = 'u32[]', space=smem, size = 0x4, offset = 0x4, fixed_abs, tag = 'smem constant byte address 0x4 - core index']
  #allocation1 [shape = 'u32[144,128]{1,0:T(1,128)}', space=vmem, size = 0x12000, scoped, tag = 'internal scratch']
  %s0 = inlined_call_operand.hbm [shape: f32[64], index: 0, kind: input, shape index: {}]
  %s1 = inlined_call_operand.vmem [shape: f32[63], index: 1, kind: input, shape index: {}]
  %s2 = inlined_call_operand.hbm [shape: f32[16,128], index: 2, kind: input, shape index: {}]
  %s3 = inlined_call_operand.hbm [shape: f32[16,128], index: 3, kind: output, shape index: {}]
  %s4 = sld [smem:[#allocation0]]
  $region57: #{tpu_custom_call.1} parent=0
    _
  %s6 = ssub.s32 1, %s4
  %s7 = scalar_select 0, %s6, %s4
  $region1: #{tpu_custom_call.1} parent=0
    #allocation2 [shape = 'u8[512]{0}', space=smem, size = 0x200, scoped, tag = 'input window, operand 0, single buffered']
    #allocation3 [shape = 's32[2]{0}', space=sflag, size = 0x8, scoped, tag = 'scoped memory for tpu_custom_call.1']
    #allocation4 [shape = 's32[2]{0}', space=sflag, size = 0x8, scoped, tag = 'scoped memory for tpu_custom_call.1']
    #allocation5 [shape = 's32[2]{0}', space=sflag, size = 0x8, scoped, tag = 'scoped memory for tpu_custom_call.1']
    #allocation6 [shape = 's32[2]{0}', space=sflag, size = 0x8, scoped, tag = 'scoped memory for tpu_custom_call.1']
    #allocation7 [shape = 'u8[512]{0}', space=smem, size = 0x200, scoped, tag = 'input window, operand 1, single buffered']
    #allocation8 [shape = 'u8[8192]{0}', space=vmem, size = 0x2000, scoped, tag = 'input window, operand 2']
    #allocation9 [shape = 'u8[8192]{0}', space=vmem, size = 0x2000, scoped, tag = 'output window, operand 0']
    %8 = vsyncpa [#allocation5], 0
    %9 = vsyncpa [#allocation6], 0
    %10 = vsyncpa [#allocation3], 0
    %s11 = scalar_lea.sflag [#allocation3], 1
    %12 = vsyncpa %s11, 0
    %13 = vsyncpa [#allocation4], 0
    %s14 = scalar_lea.sflag [#allocation4], 1
    %15 = vsyncpa %s14, 0
    loop: start=0, step=1, limit=4
    $region2: #{tpu_custom_call.1} parent=1 // loop_pre_header
      _
    $region3: #{tpu_custom_call.1} parent=1 // loop_header
      %s17 = sphi 0, %s21
      %p18 = scmp.ge.s32.totalorder %s17, 4
      %s25 = sphi 0, %s25
      %s27 = sphi 0, %s25
      %s28 = sphi 0, %s27
      %s42 = sphi 0, %s28
      %s46 = sphi 0, %s46
      %s48 = sphi 0, %s46
      %s49 = sphi 0, %s48
      %s63 = sphi 0, %s49
      %s69 = sphi 0, %s71
      %s72 = sphi 0, %s69
      %s73 = sphi 0, %s72
      %s89 = sphi 0, %s73
      %s95 = sphi 0, %s97
      %s98 = sphi 0, %s95
      %s99 = sphi 0, %s98
      %s115 = sphi 0, %s99
    $region4: #{tpu_custom_call.1} parent=1 // loop_header_branch
      %20 = sbr.rel (%p18) target = $region8
    $region5: #{tpu_custom_call.1} parent=1 // loop_body
      %s22 = ssub.s32 %s17, 1
      %s23 = ssub.s32 %s17, 2
      %s24 = sadd.s32 %s17, 1
      %s26 = sadd.s32 %s25, 1
      %p29 = scmp.eq.s32.totalorder %s17, 1
      %p30 = scmp.ne.s32.totalorder %s25, %s27
      %p31 = scmp.eq.s32.totalorder %s17, 0
      %p32 = por %p30, %p31
      %p33 = scmp.ne.s32.totalorder %s25, %s27
      %p34 = scmp.eq.s32.totalorder %s22, 1
      %p35 = por %p33, %p34
      %p36 = scmp.ne.s32.totalorder %s27, %s28
      %p37 = scmp.eq.s32.totalorder %s22, 0
      %p38 = por %p36, %p37
      %p39 = scmp.ne.s32.totalorder %s27, %s28
      %p40 = scmp.eq.s32.totalorder %s23, 1
      %p41 = por %p39, %p40
      %p43 = scmp.ne.s32.totalorder %s28, %s42
      %p44 = scmp.eq.s32.totalorder %s23, 0
      %p45 = por %p43, %p44
      %s47 = sadd.s32 %s46, 1
      %p50 = scmp.eq.s32.totalorder %s17, 1
      %p51 = scmp.ne.s32.totalorder %s46, %s48
      %p52 = scmp.eq.s32.totalorder %s17, 0
      %p53 = por %p51, %p52
      %p54 = scmp.ne.s32.totalorder %s46, %s48
      %p55 = scmp.eq.s32.totalorder %s22, 1
      %p56 = por %p54, %p55
      %p57 = scmp.ne.s32.totalorder %s48, %s49
      %p58 = scmp.eq.s32.totalorder %s22, 0
      %p59 = por %p57, %p58
      %p60 = scmp.ne.s32.totalorder %s48, %s49
      %p61 = scmp.eq.s32.totalorder %s23, 1
      %p62 = por %p60, %p61
      %p64 = scmp.ne.s32.totalorder %s49, %s63
      %p65 = scmp.eq.s32.totalorder %s23, 0
      %p66 = por %p64, %p65
      %s67 = ssub.s32 %s17, %s24
      %p68 = scmp.eq.s32.totalorder %s67, 0
      %s70 = sadd.s32 %s69, 1
      %s71 = scalar_select %p68, %s69, %s70
      %p74 = pneg %p68
      %p75 = scmp.eq.s32.totalorder %s17, 1
      %p76 = por %p74, %p75
      %p77 = scmp.ne.s32.totalorder %s69, %s72
      %p78 = scmp.eq.s32.totalorder %s17, 0
      %p79 = por %p77, %p78
      %p80 = scmp.ne.s32.totalorder %s69, %s72
      %p81 = scmp.eq.s32.totalorder %s22, 1
      %p82 = por %p80, %p81
      %p83 = scmp.ne.s32.totalorder %s72, %s73
      %p84 = scmp.eq.s32.totalorder %s22, 0
      %p85 = por %p83, %p84
      %p86 = scmp.ne.s32.totalorder %s72, %s73
      %p87 = scmp.eq.s32.totalorder %s23, 1
      %p88 = por %p86, %p87
      %p90 = scmp.ne.s32.totalorder %s73, %s89
      %p91 = scmp.eq.s32.totalorder %s23, 0
      %p92 = por %p90, %p91
      %s93 = ssub.s32 %s17, %s24
      %p94 = scmp.eq.s32.totalorder %s93, 0
      %s96 = sadd.s32 %s95, 1
      %s97 = scalar_select %p94, %s95, %s96
      %p100 = pneg %p94
      %p101 = scmp.eq.s32.totalorder %s17, 1
      %p102 = por %p100, %p101
      %p103 = scmp.ne.s32.totalorder %s95, %s98
      %p104 = scmp.eq.s32.totalorder %s17, 0
      %p105 = por %p103, %p104
      %p106 = scmp.ne.s32.totalorder %s95, %s98
      %p107 = scmp.eq.s32.totalorder %s22, 1
      %p108 = por %p106, %p107
      %p109 = scmp.ne.s32.totalorder %s98, %s99
      %p110 = scmp.eq.s32.totalorder %s22, 0
      %p111 = por %p109, %p110
      %p112 = scmp.ne.s32.totalorder %s98, %s99
      %p113 = scmp.eq.s32.totalorder %s23, 1
      %p114 = por %p112, %p113
      %p116 = scmp.ne.s32.totalorder %s99, %s115
      %p117 = scmp.eq.s32.totalorder %s23, 0
      %p118 = por %p116, %p117
      %p119 = scmp.le.s32.totalorder 1, %s17
      %p120 = scmp.lt.s32.totalorder %s17, 3
      %p121 = pnand %p119, %p120
      %p122 = pneg %p121
      // Predicated region
      $region9: #{tpu_custom_call.1} parent=5 // pred_check
        _
      $region10: #{tpu_custom_call.1} parent=5 // pred_check_branch
        %124 = sbr.rel (%p121) target = $region12
      $region11: #{tpu_custom_call.1} parent=5 // pred_region
        %s125 = ssub.s32 %s17, 1
        // Predicated region
        $region13: #{tpu_custom_call.1} parent=11 // pred_check
          %p126 = pneg %p38
        $region14: #{tpu_custom_call.1} parent=11 // pred_check_branch
          %128 = sbr.rel (%p126) target = $region16
        $region15: #{tpu_custom_call.1} parent=11 // pred_region
          %s130 = ssub.s32 16, 16
          %131 = vsyncadd [#allocation5], %s130
          %134 = dma.hbm_to_smem %s0, 16, [#allocation2], [#allocation5]
        $region16: #{tpu_custom_call.1} parent=11 // pred_fallthru
          _
        // Predicated region
        $region17: #{tpu_custom_call.1} parent=11 // pred_check
          %p135 = pneg %p59
        $region18: #{tpu_custom_call.1} parent=11 // pred_check_branch
          %137 = sbr.rel (%p135) target = $region20
        $region19: #{tpu_custom_call.1} parent=11 // pred_region
          %s139 = ssub.s32 16, 16
          %140 = vsyncadd [#allocation6], %s139
          %s142 = sshll.u32 %s1, 4
          %s143 = int_to_ptr.vmem [resolvable:$true] %s142
          %145 = dma.vmem_to_smem %s143, 16, [#allocation7], [#allocation6]
        $region20: #{tpu_custom_call.1} parent=11 // pred_fallthru
          _
      $region12: #{tpu_custom_call.1} parent=5 // pred_fallthru
        _
      %p146 = scmp.lt.s32.totalorder %s17, 2
      // Predicated region
      $region21: #{tpu_custom_call.1} parent=5 // pred_check
        %p147 = pneg %p146
      $region22: #{tpu_custom_call.1} parent=5 // pred_check_branch
        %149 = sbr.rel (%p147) target = $region24
      $region23: #{tpu_custom_call.1} parent=5 // pred_region
        // Predicated region
        $region25: #{tpu_custom_call.1} parent=23 // pred_check
          %p150 = pneg %p79
        $region26: #{tpu_custom_call.1} parent=23 // pred_check_branch
          %152 = sbr.rel (%p150) target = $region28
        $region27: #{tpu_custom_call.1} parent=23 // pred_region
          %s153 = sand.u32 %s69, 1
          %s154 = scalar_lea.sflag [#allocation3], %s153
          %s155 = sand.u32 %s69, 1
          %s156 = smul.addr %s155, 8
          %s157 = scalar_lea.vmem [#allocation8], %s156
          %s159 = ssub.s32 128, 128
          %160 = vsyncadd %s154, %s159
          %s161 = smul.addr %s17, 128
          %s162 = scalar_lea.hbm %s2, %s161
          %s164 = sshll.u32 %s157, 4
          %s165 = int_to_ptr.vmem [resolvable:$true] %s164
          %167 = dma.hbm_to_vmem [thread:$0]  %s162, 128, %s165, %s154
        $region28: #{tpu_custom_call.1} parent=23 // pred_fallthru
          _
      $region24: #{tpu_custom_call.1} parent=5 // pred_fallthru
        _
      %p168 = scmp.le.s32.totalorder 1, %s17
      %p169 = scmp.lt.s32.totalorder %s17, 3
      %p170 = pnand %p168, %p169
      %p171 = pneg %p170
      // Predicated region
      $region29: #{tpu_custom_call.1} parent=5 // pred_check
        _
      $region30: #{tpu_custom_call.1} parent=5 // pred_check_branch
        %173 = sbr.rel (%p170) target = $region32
      $region31: #{tpu_custom_call.1} parent=5 // pred_region
        %s174 = ssub.s32 %s17, 1
        // Predicated region
        $region33: #{tpu_custom_call.1} parent=31 // pred_check
          %p175 = pneg %p38
        $region34: #{tpu_custom_call.1} parent=31 // pred_check_branch
          %177 = sbr.rel (%p175) target = $region36
        $region35: #{tpu_custom_call.1} parent=31 // pred_region
          %178 = dma.done [#allocation5], 16
        $region36: #{tpu_custom_call.1} parent=31 // pred_fallthru
          _
        // Predicated region
        $region37: #{tpu_custom_call.1} parent=31 // pred_check
          %p179 = pneg %p59
        $region38: #{tpu_custom_call.1} parent=31 // pred_check_branch
          %181 = sbr.rel (%p179) target = $region40
        $region39: #{tpu_custom_call.1} parent=31 // pred_region
          %182 = dma.done [#allocation6], 16
        $region40: #{tpu_custom_call.1} parent=31 // pred_fallthru
          _
        %s183 = sand.u32 %s72, 1
        %s184 = scalar_lea.sflag [#allocation3], %s183
        %s185 = sand.u32 %s72, 1
        %s186 = smul.addr %s185, 8
        %s187 = scalar_lea.vmem [#allocation8], %s186
        // Predicated region
        $region41: #{tpu_custom_call.1} parent=31 // pred_check
          %p188 = pneg %p85
        $region42: #{tpu_custom_call.1} parent=31 // pred_check_branch
          %190 = sbr.rel (%p188) target = $region44
        $region43: #{tpu_custom_call.1} parent=31 // pred_region
          %191 = dma.done %s184, 128
        $region44: #{tpu_custom_call.1} parent=31 // pred_fallthru
          _
        %192 = sfence
        %p193 = pneg %p38
        %p194 = pneg %p35
        %p195 = pneg %p59
        %p196 = pneg %p56
        %s197 = sand.u32 %s72, 1
        %s198 = scalar_lea.sflag [#allocation3], %s197
        %s199 = sand.u32 %s72, 1
        %s200 = smul.addr %s199, 8
        %s201 = scalar_lea.vmem [#allocation8], %s200
        %p202 = pneg %p85
        %p203 = pneg %p82
        %p204 = pneg %p111
        %p205 = pneg %p108
        %s206 = sand.u32 %s98, 1
        %s207 = scalar_lea.sflag [#allocation4], %s206
        %s208 = sand.u32 %s98, 1
        %s209 = smul.addr %s208, 8
        %s210 = scalar_lea.vmem [#allocation9], %s209
        %v211 = vld [vmem:[%s187] sm:$0xff]
        %v212 = vand.u32 2147483647, %v211
        %v213 = vmul.f32 %v212, 0.70710677
        %v214 = vmul.f32 %v213, 0.3275911
        %v215 = vadd.f32 %v214, 1.0
        %v216 = vrcp.pop %v215
        %v217 = vmul.f32 %v216, 1.0614054
        %v218 = vadd.f32 %v217, -1.4531521
        %v219 = vmul.f32 %v216, %v218
        %v220 = vadd.f32 %v219, 1.4214138
        %v221 = vmul.f32 %v216, %v220
        %v222 = vadd.f32 %v221, -0.28449672
        %v223 = vmul.f32 %v216, %v222
        %v224 = vadd.f32 %v223, 0.2548296
        %v225 = vmul.f32 %v216, %v224
        %v226 = vmul.f32 %v213, %v213
        %v227 = vsub.f32 0.0, %v226
        %v228 = vmul.f32 %v227, 1.442695
        %v229 = vpow.pop %v228
        %v230 = vmul.f32 %v225, %v229
        %v231 = vsub.f32 1.0, %v230
        %v232 = vmul.f32 %v212, %v231
        %v233 = vadd.f32 %v211, %v232
        %v234 = vmul.f32 %v233, 0.5
        %s235 = sld [smem:[#allocation2]]
        %v236 = vstv %s235
        %s237 = sld [smem:[#allocation7]]
        %s238 = sld [smem:[#allocation2 + $0x1]]
        %v239 = vstv %s237
        %vm240 = vcmp.gt.f32.partialorder %v234, %v239
        %v241 = vstv %s238
        %v242 = vsel %vm240, %v241, %v236
        %s243 = sld [smem:[#allocation7 + $0x1]]
        %s244 = sld [smem:[#allocation2 + $0x2]]
        %v245 = vstv %s243
        %vm246 = vcmp.gt.f32.partialorder %v234, %v245
        %v247 = vstv %s244
        %v248 = vsel %vm246, %v247, %v242
        %s249 = sld [smem:[#allocation7 + $0x2]]
        %s250 = sld [smem:[#allocation2 + $0x3]]
        %v251 = vstv %s249
        %vm252 = vcmp.gt.f32.partialorder %v234, %v251
        %v253 = vstv %s250
        %v254 = vsel %vm252, %v253, %v248
        %s255 = sld [smem:[#allocation7 + $0x3]]
        %s256 = sld [smem:[#allocation2 + $0x4]]
        %v257 = vstv %s255
        %vm258 = vcmp.gt.f32.partialorder %v234, %v257
        %v259 = vstv %s256
        %v260 = vsel %vm258, %v259, %v254
        %s261 = sld [smem:[#allocation7 + $0x4]]
        %s262 = sld [smem:[#allocation2 + $0x5]]
        %v263 = vstv %s261
        %vm264 = vcmp.gt.f32.partialorder %v234, %v263
        %v265 = vstv %s262
        %v266 = vsel %vm264, %v265, %v260
        %s267 = sld [smem:[#allocation7 + $0x5]]
        %s268 = sld [smem:[#allocation2 + $0x6]]
        %v269 = vstv %s267
        %vm270 = vcmp.gt.f32.partialorder %v234, %v269
        %v271 = vstv %s268
        %v272 = vsel %vm270, %v271, %v266
        %s273 = sld [smem:[#allocation7 + $0x6]]
        %s274 = sld [smem:[#allocation2 + $0x7]]
        %v275 = vstv %s273
        %vm276 = vcmp.gt.f32.partialorder %v234, %v275
        %v277 = vstv %s274
        %v278 = vsel %vm276, %v277, %v272
        %s279 = sld [smem:[#allocation7 + $0x7]]
        %s280 = sld [smem:[#allocation2 + $0x8]]
        %v281 = vstv %s279
        %vm282 = vcmp.gt.f32.partialorder %v234, %v281
        %v283 = vstv %s280
        %v284 = vsel %vm282, %v283, %v278
        %s285 = sld [smem:[#allocation7 + $0x8]]
        %s286 = sld [smem:[#allocation2 + $0x9]]
        %v287 = vstv %s285
        %vm288 = vcmp.gt.f32.partialorder %v234, %v287
        %v289 = vstv %s286
        %v290 = vsel %vm288, %v289, %v284
        %s291 = sld [smem:[#allocation7 + $0x9]]
        %s292 = sld [smem:[#allocation2 + $0xa]]
        %v293 = vstv %s291
        %vm294 = vcmp.gt.f32.partialorder %v234, %v293
        %v295 = vstv %s292
        %v296 = vsel %vm294, %v295, %v290
        %s297 = sld [smem:[#allocation7 + $0xa]]
        %s298 = sld [smem:[#allocation2 + $0xb]]
        %v299 = vstv %s297
        %vm300 = vcmp.gt.f32.partialorder %v234, %v299
        %v301 = vstv %s298
        %v302 = vsel %vm300, %v301, %v296
        %s303 = sld [smem:[#allocation7 + $0xb]]
        %s304 = sld [smem:[#allocation2 + $0xc]]
        %v305 = vstv %s303
        %vm306 = vcmp.gt.f32.partialorder %v234, %v305
        %v307 = vstv %s304
        %v308 = vsel %vm306, %v307, %v302
        %s309 = sld [smem:[#allocation7 + $0xc]]
        %s310 = sld [smem:[#allocation2 + $0xd]]
        %v311 = vstv %s309
        %vm312 = vcmp.gt.f32.partialorder %v234, %v311
        %v313 = vstv %s310
        %v314 = vsel %vm312, %v313, %v308
        %s315 = sld [smem:[#allocation7 + $0xd]]
        %s316 = sld [smem:[#allocation2 + $0xe]]
        %v317 = vstv %s315
        %vm318 = vcmp.gt.f32.partialorder %v234, %v317
        %v319 = vstv %s316
        %v320 = vsel %vm318, %v319, %v314
        %s321 = sld [smem:[#allocation7 + $0xe]]
        %s322 = sld [smem:[#allocation2 + $0xf]]
        %v323 = vstv %s321
        %vm324 = vcmp.gt.f32.partialorder %v234, %v323
        %v325 = vstv %s322
        %v326 = vsel %vm324, %v325, %v320
        %s327 = sld [smem:[#allocation7 + $0xf]]
        %s328 = sld [smem:[#allocation2 + $0x10]]
        %v329 = vstv %s327
        %vm330 = vcmp.gt.f32.partialorder %v234, %v329
        %v331 = vstv %s328
        %v332 = vsel %vm330, %v331, %v326
        %s333 = sld [smem:[#allocation7 + $0x10]]
        %s334 = sld [smem:[#allocation2 + $0x11]]
        %v335 = vstv %s333
        %vm336 = vcmp.gt.f32.partialorder %v234, %v335
        %v337 = vstv %s334
        %v338 = vsel %vm336, %v337, %v332
        %s339 = sld [smem:[#allocation7 + $0x11]]
        %s340 = sld [smem:[#allocation2 + $0x12]]
        %v341 = vstv %s339
        %vm342 = vcmp.gt.f32.partialorder %v234, %v341
        %v343 = vstv %s340
        %v344 = vsel %vm342, %v343, %v338
        %s345 = sld [smem:[#allocation7 + $0x12]]
        %s346 = sld [smem:[#allocation2 + $0x13]]
        %v347 = vstv %s345
        %vm348 = vcmp.gt.f32.partialorder %v234, %v347
        %v349 = vstv %s346
        %v350 = vsel %vm348, %v349, %v344
        %s351 = sld [smem:[#allocation7 + $0x13]]
        %s352 = sld [smem:[#allocation2 + $0x14]]
        %v353 = vstv %s351
        %vm354 = vcmp.gt.f32.partialorder %v234, %v353
        %v355 = vstv %s352
        %v356 = vsel %vm354, %v355, %v350
        %s357 = sld [smem:[#allocation7 + $0x14]]
        %s358 = sld [smem:[#allocation2 + $0x15]]
        %v359 = vstv %s357
        %vm360 = vcmp.gt.f32.partialorder %v234, %v359
        %v361 = vstv %s358
        %v362 = vsel %vm360, %v361, %v356
        %s363 = sld [smem:[#allocation7 + $0x15]]
        %s364 = sld [smem:[#allocation2 + $0x16]]
        %v365 = vstv %s363
        %vm366 = vcmp.gt.f32.partialorder %v234, %v365
        %v367 = vstv %s364
        %v368 = vsel %vm366, %v367, %v362
        %s369 = sld [smem:[#allocation7 + $0x16]]
        %s370 = sld [smem:[#allocation2 + $0x17]]
        %v371 = vstv %s369
        %vm372 = vcmp.gt.f32.partialorder %v234, %v371
        %v373 = vstv %s370
        %v374 = vsel %vm372, %v373, %v368
        %s375 = sld [smem:[#allocation7 + $0x17]]
        %s376 = sld [smem:[#allocation2 + $0x18]]
        %v377 = vstv %s375
        %vm378 = vcmp.gt.f32.partialorder %v234, %v377
        %v379 = vstv %s376
        %v380 = vsel %vm378, %v379, %v374
        %s381 = sld [smem:[#allocation7 + $0x18]]
        %s382 = sld [smem:[#allocation2 + $0x19]]
        %v383 = vstv %s381
        %vm384 = vcmp.gt.f32.partialorder %v234, %v383
        %v385 = vstv %s382
        %v386 = vsel %vm384, %v385, %v380
        %s387 = sld [smem:[#allocation7 + $0x19]]
        %s388 = sld [smem:[#allocation2 + $0x1a]]
        %v389 = vstv %s387
        %vm390 = vcmp.gt.f32.partialorder %v234, %v389
        %v391 = vstv %s388
        %v392 = vsel %vm390, %v391, %v386
        %s393 = sld [smem:[#allocation7 + $0x1a]]
        %s394 = sld [smem:[#allocation2 + $0x1b]]
        %v395 = vstv %s393
        %vm396 = vcmp.gt.f32.partialorder %v234, %v395
        %v397 = vstv %s394
        %v398 = vsel %vm396, %v397, %v392
        %s399 = sld [smem:[#allocation7 + $0x1b]]
        %s400 = sld [smem:[#allocation2 + $0x1c]]
        %v401 = vstv %s399
        %vm402 = vcmp.gt.f32.partialorder %v234, %v401
        %v403 = vstv %s400
        %v404 = vsel %vm402, %v403, %v398
        %s405 = sld [smem:[#allocation7 + $0x1c]]
        %s406 = sld [smem:[#allocation2 + $0x1d]]
        %v407 = vstv %s405
        %vm408 = vcmp.gt.f32.partialorder %v234, %v407
        %v409 = vstv %s406
        %v410 = vsel %vm408, %v409, %v404
        %s411 = sld [smem:[#allocation7 + $0x1d]]
        %s412 = sld [smem:[#allocation2 + $0x1e]]
        %v413 = vstv %s411
        %vm414 = vcmp.gt.f32.partialorder %v234, %v413
        %v415 = vstv %s412
        %v416 = vsel %vm414, %v415, %v410
        %s417 = sld [smem:[#allocation7 + $0x1e]]
        %s418 = sld [smem:[#allocation2 + $0x1f]]
        %v419 = vstv %s417
        %vm420 = vcmp.gt.f32.partialorder %v234, %v419
        %v421 = vstv %s418
        %v422 = vsel %vm420, %v421, %v416
        %s423 = sld [smem:[#allocation7 + $0x1f]]
        %s424 = sld [smem:[#allocation2 + $0x20]]
        %v425 = vstv %s423
        %vm426 = vcmp.gt.f32.partialorder %v234, %v425
        %v427 = vstv %s424
        %v428 = vsel %vm426, %v427, %v422
        %s429 = sld [smem:[#allocation7 + $0x20]]
        %s430 = sld [smem:[#allocation2 + $0x21]]
        %v431 = vstv %s429
        %vm432 = vcmp.gt.f32.partialorder %v234, %v431
        %v433 = vstv %s430
        %v434 = vsel %vm432, %v433, %v428
        %s435 = sld [smem:[#allocation7 + $0x21]]
        %s436 = sld [smem:[#allocation2 + $0x22]]
        %v437 = vstv %s435
        %vm438 = vcmp.gt.f32.partialorder %v234, %v437
        %v439 = vstv %s436
        %v440 = vsel %vm438, %v439, %v434
        %s441 = sld [smem:[#allocation7 + $0x22]]
        %s442 = sld [smem:[#allocation2 + $0x23]]
        %v443 = vstv %s441
        %vm444 = vcmp.gt.f32.partialorder %v234, %v443
        %v445 = vstv %s442
        %v446 = vsel %vm444, %v445, %v440
        %s447 = sld [smem:[#allocation7 + $0x23]]
        %s448 = sld [smem:[#allocation2 + $0x24]]
        %v449 = vstv %s447
        %vm450 = vcmp.gt.f32.partialorder %v234, %v449
        %v451 = vstv %s448
        %v452 = vsel %vm450, %v451, %v446
        %s453 = sld [smem:[#allocation7 + $0x24]]
        %s454 = sld [smem:[#allocation2 + $0x25]]
        %v455 = vstv %s453
        %vm456 = vcmp.gt.f32.partialorder %v234, %v455
        %v457 = vstv %s454
        %v458 = vsel %vm456, %v457, %v452
        %s459 = sld [smem:[#allocation7 + $0x25]]
        %s460 = sld [smem:[#allocation2 + $0x26]]
        %v461 = vstv %s459
        %vm462 = vcmp.gt.f32.partialorder %v234, %v461
        %v463 = vstv %s460
        %v464 = vsel %vm462, %v463, %v458
        %s465 = sld [smem:[#allocation7 + $0x26]]
        %s466 = sld [smem:[#allocation2 + $0x27]]
        %v467 = vstv %s465
        %vm468 = vcmp.gt.f32.partialorder %v234, %v467
        %v469 = vstv %s466
        %v470 = vsel %vm468, %v469, %v464
        %s471 = sld [smem:[#allocation7 + $0x27]]
        %s472 = sld [smem:[#allocation2 + $0x28]]
        %v473 = vstv %s471
        %vm474 = vcmp.gt.f32.partialorder %v234, %v473
        %v475 = vstv %s472
        %v476 = vsel %vm474, %v475, %v470
        %s477 = sld [smem:[#allocation7 + $0x28]]
        %s478 = sld [smem:[#allocation2 + $0x29]]
        %v479 = vstv %s477
        %vm480 = vcmp.gt.f32.partialorder %v234, %v479
        %v481 = vstv %s478
        %v482 = vsel %vm480, %v481, %v476
        %s483 = sld [smem:[#allocation7 + $0x29]]
        %s484 = sld [smem:[#allocation2 + $0x2a]]
        %v485 = vstv %s483
        %vm486 = vcmp.gt.f32.partialorder %v234, %v485
        %v487 = vstv %s484
        %v488 = vsel %vm486, %v487, %v482
        %s489 = sld [smem:[#allocation7 + $0x2a]]
        %s490 = sld [smem:[#allocation2 + $0x2b]]
        %v491 = vstv %s489
        %vm492 = vcmp.gt.f32.partialorder %v234, %v491
        %v493 = vstv %s490
        %v494 = vsel %vm492, %v493, %v488
        %s495 = sld [smem:[#allocation7 + $0x2b]]
        %s496 = sld [smem:[#allocation2 + $0x2c]]
        %v497 = vstv %s495
        %vm498 = vcmp.gt.f32.partialorder %v234, %v497
        %v499 = vstv %s496
        %v500 = vsel %vm498, %v499, %v494
        %s501 = sld [smem:[#allocation7 + $0x2c]]
        %s502 = sld [smem:[#allocation2 + $0x2d]]
        %v503 = vstv %s501
        %vm504 = vcmp.gt.f32.partialorder %v234, %v503
        %v505 = vstv %s502
        %v506 = vsel %vm504, %v505, %v500
        %s507 = sld [smem:[#allocation7 + $0x2d]]
        %s508 = sld [smem:[#allocation2 + $0x2e]]
        %v509 = vstv %s507
        %vm510 = vcmp.gt.f32.partialorder %v234, %v509
        %v511 = vstv %s508
        %v512 = vsel %vm510, %v511, %v506
        %s513 = sld [smem:[#allocation7 + $0x2e]]
        %s514 = sld [smem:[#allocation2 + $0x2f]]
        %v515 = vstv %s513
        %vm516 = vcmp.gt.f32.partialorder %v234, %v515
        %v517 = vstv %s514
        %v518 = vsel %vm516, %v517, %v512
        %s519 = sld [smem:[#allocation7 + $0x2f]]
        %s520 = sld [smem:[#allocation2 + $0x30]]
        %v521 = vstv %s519
        %vm522 = vcmp.gt.f32.partialorder %v234, %v521
        %v523 = vstv %s520
        %v524 = vsel %vm522, %v523, %v518
        %s525 = sld [smem:[#allocation7 + $0x30]]
        %s526 = sld [smem:[#allocation2 + $0x31]]
        %v527 = vstv %s525
        %vm528 = vcmp.gt.f32.partialorder %v234, %v527
        %v529 = vstv %s526
        %v530 = vsel %vm528, %v529, %v524
        %s531 = sld [smem:[#allocation7 + $0x31]]
        %s532 = sld [smem:[#allocation2 + $0x32]]
        %v533 = vstv %s531
        %vm534 = vcmp.gt.f32.partialorder %v234, %v533
        %v535 = vstv %s532
        %v536 = vsel %vm534, %v535, %v530
        %s537 = sld [smem:[#allocation7 + $0x32]]
        %s538 = sld [smem:[#allocation2 + $0x33]]
        %v539 = vstv %s537
        %vm540 = vcmp.gt.f32.partialorder %v234, %v539
        %v541 = vstv %s538
        %v542 = vsel %vm540, %v541, %v536
        %s543 = sld [smem:[#allocation7 + $0x33]]
        %s544 = sld [smem:[#allocation2 + $0x34]]
        %v545 = vstv %s543
        %vm546 = vcmp.gt.f32.partialorder %v234, %v545
        %v547 = vstv %s544
        %v548 = vsel %vm546, %v547, %v542
        %s549 = sld [smem:[#allocation7 + $0x34]]
        %s550 = sld [smem:[#allocation2 + $0x35]]
        %v551 = vstv %s549
        %vm552 = vcmp.gt.f32.partialorder %v234, %v551
        %v553 = vstv %s550
        %v554 = vsel %vm552, %v553, %v548
        %s555 = sld [smem:[#allocation7 + $0x35]]
        %s556 = sld [smem:[#allocation2 + $0x36]]
        %v557 = vstv %s555
        %vm558 = vcmp.gt.f32.partialorder %v234, %v557
        %v559 = vstv %s556
        %v560 = vsel %vm558, %v559, %v554
        %s561 = sld [smem:[#allocation7 + $0x36]]
        %s562 = sld [smem:[#allocation2 + $0x37]]
        %v563 = vstv %s561
        %vm564 = vcmp.gt.f32.partialorder %v234, %v563
        %v565 = vstv %s562
        %v566 = vsel %vm564, %v565, %v560
        %s567 = sld [smem:[#allocation7 + $0x37]]
        %s568 = sld [smem:[#allocation2 + $0x38]]
        %v569 = vstv %s567
        %vm570 = vcmp.gt.f32.partialorder %v234, %v569
        %v571 = vstv %s568
        %v572 = vsel %vm570, %v571, %v566
        %s573 = sld [smem:[#allocation7 + $0x38]]
        %s574 = sld [smem:[#allocation2 + $0x39]]
        %v575 = vstv %s573
        %vm576 = vcmp.gt.f32.partialorder %v234, %v575
        %v577 = vstv %s574
        %v578 = vsel %vm576, %v577, %v572
        %s579 = sld [smem:[#allocation7 + $0x39]]
        %s580 = sld [smem:[#allocation2 + $0x3a]]
        %v581 = vstv %s579
        %vm582 = vcmp.gt.f32.partialorder %v234, %v581
        %v583 = vstv %s580
        %v584 = vsel %vm582, %v583, %v578
        %s585 = sld [smem:[#allocation7 + $0x3a]]
        %s586 = sld [smem:[#allocation2 + $0x3b]]
        %v587 = vstv %s585
        %vm588 = vcmp.gt.f32.partialorder %v234, %v587
        %v589 = vstv %s586
        %v590 = vsel %vm588, %v589, %v584
        %s591 = sld [smem:[#allocation7 + $0x3b]]
        %s592 = sld [smem:[#allocation2 + $0x3c]]
        %v593 = vstv %s591
        %vm594 = vcmp.gt.f32.partialorder %v234, %v593
        %v595 = vstv %s592
        %v596 = vsel %vm594, %v595, %v590
        %s597 = sld [smem:[#allocation7 + $0x3c]]
        %s598 = sld [smem:[#allocation2 + $0x3d]]
        %v599 = vstv %s597
        %vm600 = vcmp.gt.f32.partialorder %v234, %v599
        %v601 = vstv %s598
        %v602 = vsel %vm600, %v601, %v596
        %s603 = sld [smem:[#allocation7 + $0x3d]]
        %s604 = sld [smem:[#allocation2 + $0x3e]]
        %v605 = vstv %s603
        %vm606 = vcmp.gt.f32.partialorder %v234, %v605
        %v607 = vstv %s604
        %v608 = vsel %vm606, %v607, %v602
        %s609 = sld [smem:[#allocation7 + $0x3e]]
        %s610 = sld [smem:[#allocation2 + $0x3f]]
        %v611 = vstv %s609
        %vm612 = vcmp.gt.f32.partialorder %v234, %v611
        %v613 = vstv %s610
        %v614 = vsel %vm612, %v613, %v608
        %615 = vst [vmem:[%s210] sm:$0xff] %v614
        %s616 = sand.u32 %s98, 1
        %s617 = scalar_lea.sflag [#allocation4], %s616
        %s618 = sand.u32 %s98, 1
        %s619 = smul.addr %s618, 8
        %s620 = scalar_lea.vmem [#allocation9], %s619
        // Predicated region
        $region45: #{tpu_custom_call.1} parent=31 // pred_check
          %p621 = pneg %p108
        $region46: #{tpu_custom_call.1} parent=31 // pred_check_branch
          %623 = sbr.rel (%p621) target = $region48
        $region47: #{tpu_custom_call.1} parent=31 // pred_region
          %s625 = ssub.s32 128, 128
          %626 = vsyncadd %s617, %s625
          %s627 = smul.addr %s22, 128
          %s628 = scalar_lea.hbm %s3, %s627
          %s630 = sshll.u32 %s620, 4
          %s631 = int_to_ptr.vmem [resolvable:$true] %s630
          %633 = dma.vmem_to_hbm [thread:$0]  %s631, 128, %s628, %s617
        $region48: #{tpu_custom_call.1} parent=31 // pred_fallthru
          _
      $region32: #{tpu_custom_call.1} parent=5 // pred_fallthru
        _
      %p634 = scmp.le.s32.totalorder 2, %s17
      // Predicated region
      $region49: #{tpu_custom_call.1} parent=5 // pred_check
        %p635 = pneg %p634
      $region50: #{tpu_custom_call.1} parent=5 // pred_check_branch
        %637 = sbr.rel (%p635) target = $region52
      $region51: #{tpu_custom_call.1} parent=5 // pred_region
        %s638 = ssub.s32 %s17, 2
        // Predicated region
        $region53: #{tpu_custom_call.1} parent=51 // pred_check
          %p639 = pneg %p114
        $region54: #{tpu_custom_call.1} parent=51 // pred_check_branch
          %641 = sbr.rel (%p639) target = $region56
        $region55: #{tpu_custom_call.1} parent=51 // pred_region
          %s642 = sand.u32 %s99, 1
          %s643 = scalar_lea.sflag [#allocation4], %s642
          %s644 = sand.u32 %s99, 1
          %s645 = smul.addr %s644, 8
          %s646 = scalar_lea.vmem [#allocation9], %s645
          %647 = dma.done %s643, 128
        $region56: #{tpu_custom_call.1} parent=51 // pred_fallthru
          _
      $region52: #{tpu_custom_call.1} parent=5 // pred_fallthru
        _
    $region6: #{tpu_custom_call.1} parent=1 // loop_footer
      %s21 = sadd.s32 1, %s17
    $region7: #{tpu_custom_call.1} parent=1 // loop_footer_branch
      %16 = sbr.rel target = $region3
    $region8: #{tpu_custom_call.1} parent=1 // loop_exit
      _
    %648 = vsyncpa [#allocation3], 1
    %s649 = scalar_lea.sflag [#allocation3], 1
    %650 = vsyncpa %s649, 1
    %651 = vsyncpa [#allocation4], 1
    %s652 = scalar_lea.sflag [#allocation4], 1
    %653 = vsyncpa %s652, 1
    %654 = vsyncpa [#allocation5], 1
    %s655 = scalar_lea.sflag [#allocation5], 1
    %656 = vsyncpa %s655, 1
    %657 = vsyncpa [#allocation6], 1
    %s658 = scalar_lea.sflag [#allocation6], 1
    %659 = vsyncpa %s658, 1

</llo_original>
